<compile_context>
chip_gen: v5e
topology: v5e:2x2
jax: 0.10.0
libtpu: 0.0.40
codegen_flags: <defaults>
</compile_context>

<pallas_src>
import jax
import jax.numpy as jnp
from jax.experimental import pallas as pl
from jax.experimental.pallas import tpu as pltpu


def _mlp_kernel(x_ref, w1_ref, b1_ref, w2_ref, b2_ref, w3_ref, b3_ref, o_ref):
    # x tile: (TB, 784) f32 from HBM; cast to bf16 here (no extra HBM pass).
    x = x_ref[...].astype(jnp.bfloat16)

    # fc1 + ReLU
    h1 = jnp.dot(x, w1_ref[...], preferred_element_type=jnp.float32) + b1_ref[...]
    h1 = jnp.maximum(h1, 0.0)

    # fc2 + ReLU
    h2 = jnp.dot(h1.astype(jnp.bfloat16), w2_ref[...],
                 preferred_element_type=jnp.float32) + b2_ref[...]
    h2 = jnp.maximum(h2, 0.0)

    # fc3
    logits = jnp.dot(h2.astype(jnp.bfloat16), w3_ref[...],
                     preferred_element_type=jnp.float32) + b3_ref[...]

    # log_softmax over dim=1 (numerically stable)
    m = jnp.max(logits, axis=-1, keepdims=True)
    shifted = logits - m
    lse = jnp.log(jnp.sum(jnp.exp(shifted), axis=-1, keepdims=True))
    o_ref[...] = (shifted - lse).astype(o_ref.dtype)


def _cdiv(a, b):
    return (a + b - 1) // b


def _round_up(n, m):
    return _cdiv(n, m) * m


def mlp_forward(x, w1, b1, w2, b2, w3, b3, *, tb_max=2048):
    """x: [B, 784] float -> log-probs [B, 10] float32."""
    B, K = x.shape
    assert K == 784

    # Tile selection: at least 2 tiles once B >= 32 (both v7x TensorCores busy),
    # rows-per-tile <= tb_max, rounded to 16 so tail padding is at most ~15
    # rows per tile (avoids the round_up(B, tb) near-full-tile waste).
    min_tiles = 2 if B >= 32 else 1
    n_tiles = max(_cdiv(B, tb_max), min_tiles)
    tb = _round_up(_cdiv(B, n_tiles), 16)
    Bp = n_tiles * tb

    x = x.astype(jnp.float32)            # no-op if already f32; kernel casts per-tile
    if Bp != B:
        x = jnp.pad(x, ((0, Bp - B), (0, 0)))

    # Weights bf16 (tiny, VMEM-resident); biases f32.
    w1 = w1.astype(jnp.bfloat16)
    w2 = w2.astype(jnp.bfloat16)
    w3 = w3.astype(jnp.bfloat16)
    b1 = b1.astype(jnp.float32)
    b2 = b2.astype(jnp.float32)
    b3 = b3.astype(jnp.float32)

    def resident(shape):
        # Same block every grid step -> stays in VMEM across iterations.
        return pl.BlockSpec(shape, lambda i: tuple(0 for _ in shape))

    weight_bytes = (784 * 128 + 128 * 64 + 64 * 10) * 2 + (128 + 64 + 10) * 4
    cost = pl.CostEstimate(
        flops=2 * Bp * (784 * 128 + 128 * 64 + 64 * 10),
        transcendentals=Bp * 11,  # exp + log per row
        bytes_accessed=Bp * 784 * 4 + Bp * 10 * 4 + weight_bytes,
    )

    out = pl.pallas_call(
        _mlp_kernel,
        out_shape=jax.ShapeDtypeStruct((Bp, 10), jnp.float32),
        grid=(n_tiles,),
        in_specs=[
            pl.BlockSpec((tb, 784), lambda i: (i, 0)),   # x: tiled over batch
            resident(w1.shape), resident(b1.shape),
            resident(w2.shape), resident(b2.shape),
            resident(w3.shape), resident(b3.shape),
        ],
        out_specs=pl.BlockSpec((tb, 10), lambda i: (i, 0)),
        compiler_params=pltpu.CompilerParams(
            dimension_semantics=("parallel",),           # megacore on v7x
            vmem_limit_bytes=32 * 1024 * 1024,           # <= half of v7x physical
        ),
        cost_estimate=cost,
    )(x, w1, b1, w2, b2, w3, b3)

    return out[:B]


def init_params(key):
    """Deterministic synthetic params mimicking nn.Linear init.
    Stored as [in, out] (transpose of PyTorch's [out, in])."""
    ks = jax.random.split(key, 6)

    def uniform(k, shape, fan_in):
        bound = 1.0 / jnp.sqrt(fan_in)
        return jax.random.uniform(k, shape, jnp.float32, -bound, bound)

    w1 = uniform(ks[0], (784, 128), 784.0)
    b1 = uniform(ks[1], (1, 128), 784.0)
    w2 = uniform(ks[2], (128, 64), 128.0)
    b2 = uniform(ks[3], (1, 64), 128.0)
    w3 = uniform(ks[4], (64, 10), 64.0)
    b3 = uniform(ks[5], (1, 10), 64.0)
    return w1, b1, w2, b2, w3, b3


def _reference_forward(x, w1, b1, w2, b2, w3, b3):
    h1 = jnp.maximum(x @ w1 + b1, 0.0)
    h2 = jnp.maximum(h1 @ w2 + b2, 0.0)
    logits = h2 @ w3 + b3
    return jax.nn.log_softmax(logits, axis=-1)


if __name__ == "__main__":
    key = jax.random.PRNGKey(0)
    k_x, k_p = jax.random.split(key)

    B = 8
    # x.view(-1, 28*28): provide [B, 28, 28] and flatten in the wrapper (glue).
    x_img = jax.random.normal(k_x, (B, 28, 28), jnp.float32)
    x = x_img.reshape(-1, 28 * 28)

    params = init_params(k_p)

    out = mlp_forward(x, *params)
    out = jax.block_until_ready(out)

    # Sanity checks.
    assert out.shape == (B, 10)
    row_sums = jnp.sum(jnp.exp(out), axis=-1)
    assert bool(jnp.all(jnp.abs(row_sums - 1.0) < 1e-3))

    # NOTE: this is a bf16-matmul variant of the f32 PyTorch reference;
    # the tolerance below reflects that quantization, not bit-accuracy.
    ref = _reference_forward(x, *params)
    assert bool(jnp.all(jnp.abs(out - ref) < 0.1))

    print("KERNEL_OK")
</pallas_src>

<mosaic_0001>
module attributes {stable_mosaic.version = 11 : i64} {
  func.func @_mlp_kernel(%arg0: i32, %arg1: memref<16x784xf32, #tpu.memory_space<vmem>>, %arg2: memref<784x128xbf16, #tpu.memory_space<vmem>>, %arg3: memref<1x128xf32, #tpu.memory_space<vmem>>, %arg4: memref<128x64xbf16, #tpu.memory_space<vmem>>, %arg5: memref<1x64xf32, #tpu.memory_space<vmem>>, %arg6: memref<64x10xbf16, #tpu.memory_space<vmem>>, %arg7: memref<1x10xf32, #tpu.memory_space<vmem>>, %arg8: memref<16x10xf32, #tpu.memory_space<vmem>>) attributes {dimension_semantics = [#tpu.dimension_semantics<parallel>], iteration_bounds = array<i64: 1>, scalar_prefetch = 0 : i64, scratch_operands = 0 : i64, tpu.core_type = #tpu.core_type<tc>, window_params = [{transform_indices = @transform_0, window_bounds = array<i64: 16, 784>}, {pipeline_mode = #tpu.pipeline_mode<synchronous>, transform_indices = @transform_1, window_bounds = array<i64: 784, 128>}, {pipeline_mode = #tpu.pipeline_mode<synchronous>, transform_indices = @transform_2, window_bounds = array<i64: 1, 128>}, {pipeline_mode = #tpu.pipeline_mode<synchronous>, transform_indices = @transform_3, window_bounds = array<i64: 128, 64>}, {pipeline_mode = #tpu.pipeline_mode<synchronous>, transform_indices = @transform_4, window_bounds = array<i64: 1, 64>}, {pipeline_mode = #tpu.pipeline_mode<synchronous>, transform_indices = @transform_5, window_bounds = array<i64: 64, 10>}, {pipeline_mode = #tpu.pipeline_mode<synchronous>, transform_indices = @transform_6, window_bounds = array<i64: 1, 10>}, {transform_indices = @transform_7, window_bounds = array<i64: 16, 10>}]} {
    %c0 = arith.constant 0 : index
    %c0_0 = arith.constant 0 : index
    %0 = vector.load %arg1[%c0, %c0_0] : memref<16x784xf32, #tpu.memory_space<vmem>>, vector<16x784xf32>
    %1 = arith.truncf %0 : vector<16x784xf32> to vector<16x784xbf16>
    %c0_1 = arith.constant 0 : index
    %c0_2 = arith.constant 0 : index
    %2 = vector.load %arg2[%c0_1, %c0_2] : memref<784x128xbf16, #tpu.memory_space<vmem>>, vector<784x128xbf16>
    %cst = arith.constant dense<0.000000e+00> : vector<16x128xf32>
    %3 = tpu.matmul %1, %2, %cst {dimension_numbers = #tpu.dot_dimension_numbers<[1], [0], [0], [1], [0, 0, 1, 1], [], []>} : vector<16x784xbf16>, vector<784x128xbf16>, vector<16x128xf32> -> vector<16x128xf32>
    %c0_3 = arith.constant 0 : index
    %c0_4 = arith.constant 0 : index
    %4 = vector.load %arg3[%c0_3, %c0_4] : memref<1x128xf32, #tpu.memory_space<vmem>>, vector<1x128xf32>
    %5 = vector.broadcast %4 : vector<1x128xf32> to vector<16x128xf32>
    %6 = arith.addf %3, %5 : vector<16x128xf32>
    %cst_5 = arith.constant 0.000000e+00 : f32
    %7 = vector.broadcast %cst_5 : f32 to vector<16x128xf32>
    %8 = arith.maximumf %6, %7 : vector<16x128xf32>
    %9 = arith.truncf %8 : vector<16x128xf32> to vector<16x128xbf16>
    %c0_6 = arith.constant 0 : index
    %c0_7 = arith.constant 0 : index
    %10 = vector.load %arg4[%c0_6, %c0_7] : memref<128x64xbf16, #tpu.memory_space<vmem>>, vector<128x64xbf16>
    %cst_8 = arith.constant dense<0.000000e+00> : vector<16x64xf32>
    %11 = tpu.matmul %9, %10, %cst_8 {dimension_numbers = #tpu.dot_dimension_numbers<[1], [0], [0], [1], [0, 0, 1, 1], [], []>} : vector<16x128xbf16>, vector<128x64xbf16>, vector<16x64xf32> -> vector<16x64xf32>
    %c0_9 = arith.constant 0 : index
    %c0_10 = arith.constant 0 : index
    %12 = vector.load %arg5[%c0_9, %c0_10] : memref<1x64xf32, #tpu.memory_space<vmem>>, vector<1x64xf32>
    %13 = vector.broadcast %12 : vector<1x64xf32> to vector<16x64xf32>
    %14 = arith.addf %11, %13 : vector<16x64xf32>
    %cst_11 = arith.constant 0.000000e+00 : f32
    %15 = vector.broadcast %cst_11 : f32 to vector<16x64xf32>
    %16 = arith.maximumf %14, %15 : vector<16x64xf32>
    %17 = arith.truncf %16 : vector<16x64xf32> to vector<16x64xbf16>
    %c0_12 = arith.constant 0 : index
    %c0_13 = arith.constant 0 : index
    %18 = vector.load %arg6[%c0_12, %c0_13] : memref<64x10xbf16, #tpu.memory_space<vmem>>, vector<64x10xbf16>
    %cst_14 = arith.constant dense<0.000000e+00> : vector<16x10xf32>
    %19 = tpu.matmul %17, %18, %cst_14 {dimension_numbers = #tpu.dot_dimension_numbers<[1], [0], [0], [1], [0, 0, 1, 1], [], []>} : vector<16x64xbf16>, vector<64x10xbf16>, vector<16x10xf32> -> vector<16x10xf32>
    %c0_15 = arith.constant 0 : index
    %c0_16 = arith.constant 0 : index
    %20 = vector.load %arg7[%c0_15, %c0_16] : memref<1x10xf32, #tpu.memory_space<vmem>>, vector<1x10xf32>
    %21 = vector.broadcast %20 : vector<1x10xf32> to vector<16x10xf32>
    %22 = arith.addf %19, %21 : vector<16x10xf32>
    %cst_17 = arith.constant dense<0xFF800000> : vector<16xf32>
    %23 = vector.multi_reduction <maximumf>, %22, %cst_17 [1] : vector<16x10xf32> to vector<16xf32>
    %24 = vector.shape_cast %23 : vector<16xf32> to vector<16x1xf32>
    %25 = vector.broadcast %24 : vector<16x1xf32> to vector<16x10xf32>
    %26 = arith.subf %22, %25 : vector<16x10xf32>
    %27 = math.exp %26 : vector<16x10xf32>
    %cst_18 = arith.constant dense<0.000000e+00> : vector<16xf32>
    %28 = vector.multi_reduction <add>, %27, %cst_18 [1] : vector<16x10xf32> to vector<16xf32>
    %29 = vector.shape_cast %28 : vector<16xf32> to vector<16x1xf32>
    %30 = math.log %29 : vector<16x1xf32>
    %31 = vector.broadcast %30 : vector<16x1xf32> to vector<16x10xf32>
    %32 = arith.subf %26, %31 : vector<16x10xf32>
    %c0_19 = arith.constant 0 : index
    %c0_20 = arith.constant 0 : index
    %33 = vector.load %arg8[%c0_19, %c0_20] : memref<16x10xf32, #tpu.memory_space<vmem>>, vector<16x10xf32>
    tpu.vector_store %arg8[%c0_19, %c0_20], %32 {strides = array<i32>} : memref<16x10xf32, #tpu.memory_space<vmem>>, vector<16x10xf32>,
    return
  }
  func.func @transform_0(%arg0: i32) -> (i32, i32) {
    %c0_i32 = arith.constant 0 : i32
    %c0_i32_0 = arith.constant 0 : i32
    return %arg0, %c0_i32 : i32, i32
  }
  func.func @transform_1(%arg0: i32) -> (i32, i32) {
    %c0_i32 = arith.constant 0 : i32
    %c0_i32_0 = arith.constant 0 : i32
    %c0_i32_1 = arith.constant 0 : i32
    return %c0_i32, %c0_i32_0 : i32, i32
  }
  func.func @transform_2(%arg0: i32) -> (i32, i32) {
    %c0_i32 = arith.constant 0 : i32
    %c0_i32_0 = arith.constant 0 : i32
    %c0_i32_1 = arith.constant 0 : i32
    return %c0_i32, %c0_i32_0 : i32, i32
  }
  func.func @transform_3(%arg0: i32) -> (i32, i32) {
    %c0_i32 = arith.constant 0 : i32
    %c0_i32_0 = arith.constant 0 : i32
    %c0_i32_1 = arith.constant 0 : i32
    return %c0_i32, %c0_i32_0 : i32, i32
  }
  func.func @transform_4(%arg0: i32) -> (i32, i32) {
    %c0_i32 = arith.constant 0 : i32
    %c0_i32_0 = arith.constant 0 : i32
    %c0_i32_1 = arith.constant 0 : i32
    return %c0_i32, %c0_i32_0 : i32, i32
  }
  func.func @transform_5(%arg0: i32) -> (i32, i32) {
    %c0_i32 = arith.constant 0 : i32
    %c0_i32_0 = arith.constant 0 : i32
    %c0_i32_1 = arith.constant 0 : i32
    return %c0_i32, %c0_i32_0 : i32, i32
  }
  func.func @transform_6(%arg0: i32) -> (i32, i32) {
    %c0_i32 = arith.constant 0 : i32
    %c0_i32_0 = arith.constant 0 : i32
    %c0_i32_1 = arith.constant 0 : i32
    return %c0_i32, %c0_i32_0 : i32, i32
  }
  func.func @transform_7(%arg0: i32) -> (i32, i32) {
    %c0_i32 = arith.constant 0 : i32
    %c0_i32_0 = arith.constant 0 : i32
    return %arg0, %c0_i32 : i32, i32
  }
}

</mosaic_0001>

<llo_original>
// kernel: tpu_custom_call.1
$region0: #{tpu_custom_call.1}
  #allocation0 [shape = 'u32[]', space=smem, size = 0x4, offset = 0x4, fixed_abs, tag = 'smem constant byte address 0x4 - core index']
  #allocation1 [shape = 'u32[72,128]{1,0:T(1,128)}', space=vmem, size = 0x9000, scoped, tag = 'internal scratch']
  %s0 = inlined_call_operand.vmem [shape: f32[16,784], index: 0, kind: input, shape index: {}]
  %s1 = inlined_call_operand.hbm [shape: bf16[784,128], index: 1, kind: input, shape index: {}]
  %s2 = inlined_call_operand.vmem [shape: f32[1,128], index: 2, kind: input, shape index: {}]
  %s3 = inlined_call_operand.vmem [shape: bf16[128,64], index: 3, kind: input, shape index: {}]
  %s4 = inlined_call_operand.vmem [shape: f32[1,64], index: 4, kind: input, shape index: {}]
  %s5 = inlined_call_operand.vmem [shape: bf16[64,10], index: 5, kind: input, shape index: {}]
  %s6 = inlined_call_operand.vmem [shape: f32[1,10], index: 6, kind: input, shape index: {}]
  %s7 = inlined_call_operand.hbm [shape: f32[16,10], index: 7, kind: output, shape index: {}]
  %s8 = sld [smem:[#allocation0]]
  $region42: #{tpu_custom_call.1} parent=0
    _
  %s10 = ssub.s32 1, %s8
  %s11 = scalar_select 0, %s10, %s8
  $region1: #{tpu_custom_call.1} parent=0
    #allocation2 [shape = 'u8[200704]{0}', space=vmem, size = 0x31000, scoped, tag = 'input window, operand 1, single buffered']
    #allocation3 [shape = 's32[1]{0}', space=sflag, size = 0x4, scoped, tag = 'scoped memory for tpu_custom_call.1']
    #allocation4 [shape = 's32[1]{0}', space=sflag, size = 0x4, scoped, tag = 'scoped memory for tpu_custom_call.1']
    #allocation5 [shape = 'u8[8192]{0}', space=vmem, size = 0x2000, scoped, tag = 'output window, operand 0, single buffered']
    %12 = vsyncpa [#allocation3], 0
    %13 = vsyncpa [#allocation4], 0
    // Predicated region
    $region2: #{tpu_custom_call.1} parent=1 // pred_check
      _
    $region3: #{tpu_custom_call.1} parent=1 // pred_check_branch
      %15 = sbr.rel (0) target = $region5
    $region4: #{tpu_custom_call.1} parent=1 // pred_region
      _
    $region5: #{tpu_custom_call.1} parent=1 // pred_fallthru
      _
    // Predicated region
    $region6: #{tpu_custom_call.1} parent=1 // pred_check
      _
    $region7: #{tpu_custom_call.1} parent=1 // pred_check_branch
      %17 = sbr.rel (0) target = $region9
    $region8: #{tpu_custom_call.1} parent=1 // pred_region
      %19 = vsyncadd [#allocation3], 0
      %s20 = sshll.u32 %s1, 4
      %s21 = int_to_ptr.hbm [resolvable:$true] %s20
      %s22 = sshll.u32 [#allocation2], 4
      %s23 = int_to_ptr.vmem [resolvable:$true] %s22
      %28 = dma.hbm_to_vmem [thread:$0]  %s21, 6272, %s23, [#allocation3], 64, 64, 4
    $region9: #{tpu_custom_call.1} parent=1 // pred_fallthru
      _
    // Predicated region
    $region10: #{tpu_custom_call.1} parent=1 // pred_check
      _
    $region11: #{tpu_custom_call.1} parent=1 // pred_check_branch
      %30 = sbr.rel (0) target = $region13
    $region12: #{tpu_custom_call.1} parent=1 // pred_region
      _
    $region13: #{tpu_custom_call.1} parent=1 // pred_fallthru
      _
    // Predicated region
    $region14: #{tpu_custom_call.1} parent=1 // pred_check
      _
    $region15: #{tpu_custom_call.1} parent=1 // pred_check_branch
      %32 = sbr.rel (0) target = $region17
    $region16: #{tpu_custom_call.1} parent=1 // pred_region
      _
    $region17: #{tpu_custom_call.1} parent=1 // pred_fallthru
      _
    // Predicated region
    $region18: #{tpu_custom_call.1} parent=1 // pred_check
      _
    $region19: #{tpu_custom_call.1} parent=1 // pred_check_branch
      %34 = sbr.rel (0) target = $region21
    $region20: #{tpu_custom_call.1} parent=1 // pred_region
      _
    $region21: #{tpu_custom_call.1} parent=1 // pred_fallthru
      _
    // Predicated region
    $region22: #{tpu_custom_call.1} parent=1 // pred_check
      _
    $region23: #{tpu_custom_call.1} parent=1 // pred_check_branch
      %36 = sbr.rel (0) target = $region25
    $region24: #{tpu_custom_call.1} parent=1 // pred_region
      _
    $region25: #{tpu_custom_call.1} parent=1 // pred_fallthru
      _
    // Predicated region
    $region26: #{tpu_custom_call.1} parent=1 // pred_check
      _
    $region27: #{tpu_custom_call.1} parent=1 // pred_check_branch
      %38 = sbr.rel (0) target = $region29
    $region28: #{tpu_custom_call.1} parent=1 // pred_region
      _
    $region29: #{tpu_custom_call.1} parent=1 // pred_fallthru
      _
    // Predicated region
    $region30: #{tpu_custom_call.1} parent=1 // pred_check
      _
    $region31: #{tpu_custom_call.1} parent=1 // pred_check_branch
      %40 = sbr.rel (0) target = $region33
    $region32: #{tpu_custom_call.1} parent=1 // pred_region
      %42 = dma.done [#allocation3], 6272
    $region33: #{tpu_custom_call.1} parent=1 // pred_fallthru
      _
    %v44 = vld [vmem:[%s0] sm:$0xff]
    %v45 = vld [vmem:[%s0 + $0x8] sm:$0xff]
    %v46 = vld [vmem:[%s0 + $0x10] sm:$0xff]
    %v47 = vld [vmem:[%s0 + $0x18] sm:$0xff]
    %v48 = vld [vmem:[%s0 + $0x20] sm:$0xff]
    %v49 = vld [vmem:[%s0 + $0x28] sm:$0xff]
    %v50 = vld [vmem:[%s0 + $0x30] sm:$0xff]
    %v51 = vld [vmem:[%s0 + $0x38] sm:$0xff]
    %v52 = vld [vmem:[%s0 + $0x40] sm:$0xff]
    %v53 = vld [vmem:[%s0 + $0x48] sm:$0xff]
    %v54 = vld [vmem:[%s0 + $0x50] sm:$0xff]
    %v55 = vld [vmem:[%s0 + $0x58] sm:$0xff]
    %v56 = vld [vmem:[%s0 + $0x60] sm:$0xff]
    %v57 = vld [vmem:[%s0 + $0x68] sm:$0xff]
    %v58 = vpack.c.bf16 %v51, %v44
    %v59 = vpack.c.bf16 %v52, %v45
    %v60 = vpack.c.bf16 %v53, %v46
    %v61 = vpack.c.bf16 %v54, %v47
    %v62 = vpack.c.bf16 %v55, %v48
    %v63 = vpack.c.bf16 %v56, %v49
    %v64 = vpack.c.bf16 %v57, %v50
    %v65 = vld [vmem:[#allocation2] sm:$0xf]
    %v66 = vld [vmem:[#allocation2 + $0x4] sm:$0xf]
    %v67 = vld [vmem:[#allocation2 + $0x8] sm:$0xf]
    %v68 = vld [vmem:[#allocation2 + $0xc] sm:$0xf]
    %v69 = vld [vmem:[#allocation2 + $0x10] sm:$0xf]
    %v70 = vld [vmem:[#allocation2 + $0x14] sm:$0xf]
    %v71 = vld [vmem:[#allocation2 + $0x18] sm:$0xf]
    %v72 = vld [vmem:[#allocation2 + $0x1c] sm:$0xf]
    %v73 = vld [vmem:[#allocation2 + $0x20] sm:$0xf]
    %v74 = vld [vmem:[#allocation2 + $0x24] sm:$0xf]
    %v75 = vld [vmem:[#allocation2 + $0x28] sm:$0xf]
    %v76 = vld [vmem:[#allocation2 + $0x2c] sm:$0xf]
    %v77 = vld [vmem:[#allocation2 + $0x30] sm:$0xf]
    %v78 = vld [vmem:[#allocation2 + $0x34] sm:$0xf]
    %v79 = vld [vmem:[#allocation2 + $0x38] sm:$0xf]
    %v80 = vld [vmem:[#allocation2 + $0x3c] sm:$0xf]
    %v81 = vld [vmem:[#allocation2 + $0x40] sm:$0xf]
    %v82 = vld [vmem:[#allocation2 + $0x44] sm:$0xf]
    %v83 = vld [vmem:[#allocation2 + $0x48] sm:$0xf]
    %v84 = vld [vmem:[#allocation2 + $0x4c] sm:$0xf]
    %v85 = vld [vmem:[#allocation2 + $0x50] sm:$0xf]
    %v86 = vld [vmem:[#allocation2 + $0x54] sm:$0xf]
    %v87 = vld [vmem:[#allocation2 + $0x58] sm:$0xf]
    %v88 = vld [vmem:[#allocation2 + $0x5c] sm:$0xf]
    %v89 = vld [vmem:[#allocation2 + $0x60] sm:$0xf]
    %v90 = vld [vmem:[#allocation2 + $0x64] sm:$0xf]
    %v91 = vld [vmem:[#allocation2 + $0x68] sm:$0xf]
    %v92 = vld [vmem:[#allocation2 + $0x6c] sm:$0xf]
    %v93 = vld [vmem:[#allocation2 + $0x70] sm:$0xf]
    %v94 = vld [vmem:[#allocation2 + $0x74] sm:$0xf]
    %v95 = vld [vmem:[#allocation2 + $0x78] sm:$0xf]
    %v96 = vld [vmem:[#allocation2 + $0x7c] sm:$0xf]
    %v97 = vld [vmem:[#allocation2 + $0x80] sm:$0xf]
    %v98 = vld [vmem:[#allocation2 + $0x84] sm:$0xf]
    %v99 = vld [vmem:[#allocation2 + $0x88] sm:$0xf]
    %v100 = vld [vmem:[#allocation2 + $0x8c] sm:$0xf]
    %v101 = vld [vmem:[#allocation2 + $0x90] sm:$0xf]
    %v102 = vld [vmem:[#allocation2 + $0x94] sm:$0xf]
    %v103 = vld [vmem:[#allocation2 + $0x98] sm:$0xf]
    %v104 = vld [vmem:[#allocation2 + $0x9c] sm:$0xf]
    %v105 = vld [vmem:[#allocation2 + $0xa0] sm:$0xf]
    %v106 = vld [vmem:[#allocation2 + $0xa4] sm:$0xf]
    %v107 = vld [vmem:[#allocation2 + $0xa8] sm:$0xf]
    %v108 = vld [vmem:[#allocation2 + $0xac] sm:$0xf]
    %v109 = vld [vmem:[#allocation2 + $0xb0] sm:$0xf]
    %v110 = vld [vmem:[#allocation2 + $0xb4] sm:$0xf]
    %v111 = vld [vmem:[#allocation2 + $0xb8] sm:$0xf]
    %v112 = vld [vmem:[#allocation2 + $0xbc] sm:$0xf]
    %v113 = vld [vmem:[#allocation2 + $0xc0] sm:$0xf]
    %v114 = vld [vmem:[#allocation2 + $0xc4] sm:$0xf]
    %v115 = vld [vmem:[#allocation2 + $0xc8] sm:$0xf]
    %v116 = vld [vmem:[#allocation2 + $0xcc] sm:$0xf]
    %v117 = vld [vmem:[#allocation2 + $0xd0] sm:$0xf]
    %v118 = vld [vmem:[#allocation2 + $0xd4] sm:$0xf]
    %v119 = vld [vmem:[#allocation2 + $0xd8] sm:$0xf]
    %v120 = vld [vmem:[#allocation2 + $0xdc] sm:$0xf]
    %v121 = vld [vmem:[#allocation2 + $0xe0] sm:$0xf]
    %v122 = vld [vmem:[#allocation2 + $0xe4] sm:$0xf]
    %v123 = vld [vmem:[#allocation2 + $0xe8] sm:$0xf]
    %v124 = vld [vmem:[#allocation2 + $0xec] sm:$0xf]
    %v125 = vld [vmem:[#allocation2 + $0xf0] sm:$0xf]
    %v126 = vld [vmem:[#allocation2 + $0xf4] sm:$0xf]
    %v127 = vld [vmem:[#allocation2 + $0xf8] sm:$0xf]
    %v128 = vld [vmem:[#allocation2 + $0xfc] sm:$0xf]
    %v129 = vld [vmem:[#allocation2 + $0x100] sm:$0xf]
    %v130 = vld [vmem:[#allocation2 + $0x104] sm:$0xf]
    %v131 = vld [vmem:[#allocation2 + $0x108] sm:$0xf]
    %v132 = vld [vmem:[#allocation2 + $0x10c] sm:$0xf]
    %v133 = vld [vmem:[#allocation2 + $0x110] sm:$0xf]
    %v134 = vld [vmem:[#allocation2 + $0x114] sm:$0xf]
    %v135 = vld [vmem:[#allocation2 + $0x118] sm:$0xf]
    %v136 = vld [vmem:[#allocation2 + $0x11c] sm:$0xf]
    %v137 = vld [vmem:[#allocation2 + $0x120] sm:$0xf]
    %v138 = vld [vmem:[#allocation2 + $0x124] sm:$0xf]
    %v139 = vld [vmem:[#allocation2 + $0x128] sm:$0xf]
    %v140 = vld [vmem:[#allocation2 + $0x12c] sm:$0xf]
    %v141 = vld [vmem:[#allocation2 + $0x130] sm:$0xf]
    %v142 = vld [vmem:[#allocation2 + $0x134] sm:$0xf]
    %v143 = vld [vmem:[#allocation2 + $0x138] sm:$0xf]
    %v144 = vld [vmem:[#allocation2 + $0x13c] sm:$0xf]
    %v145 = vld [vmem:[#allocation2 + $0x140] sm:$0xf]
    %v146 = vld [vmem:[#allocation2 + $0x144] sm:$0xf]
    %v147 = vld [vmem:[#allocation2 + $0x148] sm:$0xf]
    %v148 = vld [vmem:[#allocation2 + $0x14c] sm:$0xf]
    %v149 = vld [vmem:[#allocation2 + $0x150] sm:$0xf]
    %v150 = vld [vmem:[#allocation2 + $0x154] sm:$0xf]
    %v151 = vld [vmem:[#allocation2 + $0x158] sm:$0xf]
    %v152 = vld [vmem:[#allocation2 + $0x15c] sm:$0xf]
    %v153 = vld [vmem:[#allocation2 + $0x160] sm:$0xf]
    %v154 = vld [vmem:[#allocation2 + $0x164] sm:$0xf]
    %v155 = vld [vmem:[#allocation2 + $0x168] sm:$0xf]
    %v156 = vld [vmem:[#allocation2 + $0x16c] sm:$0xf]
    %v157 = vld [vmem:[#allocation2 + $0x170] sm:$0xf]
    %v158 = vld [vmem:[#allocation2 + $0x174] sm:$0xf]
    %v159 = vld [vmem:[#allocation2 + $0x178] sm:$0xf]
    %v160 = vld [vmem:[#allocation2 + $0x17c] sm:$0xf]
    %v161 = vld [vmem:[#allocation2 + $0x180] sm:$0xf]
    %v162 = vld [vmem:[#allocation2 + $0x184] sm:$0xf]
    %v163 = vld [vmem:[%s2] sm:$0x1]
    %v165 = vperm.slane %v163, 0
    %v265 = vunpack.c.l.b16 %v65
    %v266 = vunpack.c.l.b16 %v66
    %v267 = vunpack.c.l.b16 %v67
    %v268 = vunpack.c.l.b16 %v68
    %v269 = vunpack.c.l.b16 %v69
    %v270 = vunpack.c.l.b16 %v70
    %v271 = vunpack.c.l.b16 %v71
    %v272 = vunpack.c.l.b16 %v72
    %v273 = vunpack.c.l.b16 %v73
    %v274 = vunpack.c.l.b16 %v74
    %v275 = vunpack.c.l.b16 %v75
    %v276 = vunpack.c.l.b16 %v76
    %v277 = vunpack.c.l.b16 %v77
    %v278 = vunpack.c.l.b16 %v78
    %v279 = vunpack.c.l.b16 %v79
    %v280 = vunpack.c.l.b16 %v80
    %v281 = vunpack.c.l.b16 %v81
    %v282 = vunpack.c.l.b16 %v82
    %v283 = vunpack.c.l.b16 %v83
    %v284 = vunpack.c.l.b16 %v84
    %v285 = vunpack.c.l.b16 %v85
    %v286 = vunpack.c.l.b16 %v86
    %v287 = vunpack.c.l.b16 %v87
    %v288 = vunpack.c.l.b16 %v88
    %v289 = vunpack.c.l.b16 %v89
    %v290 = vunpack.c.l.b16 %v90
    %v291 = vunpack.c.l.b16 %v91
    %v292 = vunpack.c.l.b16 %v92
    %v293 = vunpack.c.l.b16 %v93
    %v294 = vunpack.c.l.b16 %v94
    %v295 = vunpack.c.l.b16 %v95
    %v296 = vunpack.c.l.b16 %v96
    %v297 = vunpack.c.l.b16 %v97
    %v298 = vunpack.c.l.b16 %v98
    %v299 = vunpack.c.l.b16 %v99
    %v300 = vunpack.c.l.b16 %v100
    %v301 = vunpack.c.l.b16 %v101
    %v302 = vunpack.c.l.b16 %v102
    %v303 = vunpack.c.l.b16 %v103
    %v304 = vunpack.c.l.b16 %v104
    %v305 = vunpack.c.l.b16 %v105
    %v306 = vunpack.c.l.b16 %v106
    %v307 = vunpack.c.l.b16 %v107
    %v308 = vunpack.c.l.b16 %v108
    %v309 = vunpack.c.l.b16 %v109
    %v310 = vunpack.c.l.b16 %v110
    %v311 = vunpack.c.l.b16 %v111
    %v312 = vunpack.c.l.b16 %v112
    %v313 = vunpack.c.l.b16 %v113
    %v314 = vunpack.c.l.b16 %v114
    %v315 = vunpack.c.l.b16 %v115
    %v316 = vunpack.c.l.b16 %v116
    %v317 = vunpack.c.l.b16 %v117
    %v318 = vunpack.c.l.b16 %v118
    %v319 = vunpack.c.l.b16 %v119
    %v320 = vunpack.c.l.b16 %v120
    %v321 = vunpack.c.l.b16 %v121
    %v322 = vunpack.c.l.b16 %v122
    %v323 = vunpack.c.l.b16 %v123
    %v324 = vunpack.c.l.b16 %v124
    %v325 = vunpack.c.l.b16 %v125
    %v326 = vunpack.c.l.b16 %v126
    %v327 = vunpack.c.l.b16 %v127
    %v328 = vunpack.c.l.b16 %v128
    %v329 = vunpack.c.l.b16 %v129
    %v330 = vunpack.c.l.b16 %v130
    %v331 = vunpack.c.l.b16 %v131
    %v332 = vunpack.c.l.b16 %v132
    %v333 = vunpack.c.l.b16 %v133
    %v334 = vunpack.c.l.b16 %v134
    %v335 = vunpack.c.l.b16 %v135
    %v336 = vunpack.c.l.b16 %v136
    %v337 = vunpack.c.l.b16 %v137
    %v338 = vunpack.c.l.b16 %v138
    %v339 = vunpack.c.l.b16 %v139
    %v340 = vunpack.c.l.b16 %v140
    %v341 = vunpack.c.l.b16 %v141
    %v342 = vunpack.c.l.b16 %v142
    %v343 = vunpack.c.l.b16 %v143
    %v344 = vunpack.c.l.b16 %v144
    %v345 = vunpack.c.l.b16 %v145
    %v346 = vunpack.c.l.b16 %v146
    %v347 = vunpack.c.l.b16 %v147
    %v348 = vunpack.c.l.b16 %v148
    %v349 = vunpack.c.l.b16 %v149
    %v350 = vunpack.c.l.b16 %v150
    %v351 = vunpack.c.l.b16 %v151
    %v352 = vunpack.c.l.b16 %v152
    %v353 = vunpack.c.l.b16 %v153
    %v354 = vunpack.c.l.b16 %v154
    %v355 = vunpack.c.l.b16 %v155
    %v356 = vunpack.c.l.b16 %v156
    %v357 = vunpack.c.l.b16 %v157
    %v358 = vunpack.c.l.b16 %v158
    %v359 = vunpack.c.l.b16 %v159
    %v360 = vunpack.c.l.b16 %v160
    %v361 = vunpack.c.l.b16 %v161
    %v362 = vunpack.c.l.b16 %v162
    %v363 = vpack.c.b16 %v266, %v265
    %v364 = vpack.c.b16 %v268, %v267
    %v365 = vpack.c.b16 %v270, %v269
    %v366 = vpack.c.b16 %v272, %v271
    %v367 = vpack.c.b16 %v274, %v273
    %v368 = vpack.c.b16 %v276, %v275
    %v369 = vpack.c.b16 %v278, %v277
    %v370 = vpack.c.b16 %v280, %v279
    %v371 = vpack.c.b16 %v282, %v281
    %v372 = vpack.c.b16 %v284, %v283
    %v373 = vpack.c.b16 %v286, %v285
    %v374 = vpack.c.b16 %v288, %v287
    %v375 = vpack.c.b16 %v290, %v289
    %v376 = vpack.c.b16 %v292, %v291
    %v377 = vpack.c.b16 %v294, %v293
    %v378 = vpack.c.b16 %v296, %v295
    %v379 = vpack.c.b16 %v298, %v297
    %v380 = vpack.c.b16 %v300, %v299
    %v381 = vpack.c.b16 %v302, %v301
    %v382 = vpack.c.b16 %v304, %v303
    %v383 = vpack.c.b16 %v306, %v305
    %v384 = vpack.c.b16 %v308, %v307
    %v385 = vpack.c.b16 %v310, %v309
    %v386 = vpack.c.b16 %v312, %v311
    %v387 = vpack.c.b16 %v314, %v313
    %v388 = vpack.c.b16 %v316, %v315
    %v389 = vpack.c.b16 %v318, %v317
    %v390 = vpack.c.b16 %v320, %v319
    %v391 = vpack.c.b16 %v322, %v321
    %v392 = vpack.c.b16 %v324, %v323
    %v393 = vpack.c.b16 %v326, %v325
    %v394 = vpack.c.b16 %v328, %v327
    %v395 = vpack.c.b16 %v330, %v329
    %v396 = vpack.c.b16 %v332, %v331
    %v397 = vpack.c.b16 %v334, %v333
    %v398 = vpack.c.b16 %v336, %v335
    %v399 = vpack.c.b16 %v338, %v337
    %v400 = vpack.c.b16 %v340, %v339
    %v401 = vpack.c.b16 %v342, %v341
    %v402 = vpack.c.b16 %v344, %v343
    %v403 = vpack.c.b16 %v346, %v345
    %v404 = vpack.c.b16 %v348, %v347
    %v405 = vpack.c.b16 %v350, %v349
    %v406 = vpack.c.b16 %v352, %v351
    %v407 = vpack.c.b16 %v354, %v353
    %v408 = vpack.c.b16 %v356, %v355
    %v409 = vpack.c.b16 %v358, %v357
    %v410 = vpack.c.b16 %v360, %v359
    %v411 = vpack.c.b16 %v362, %v361
    %vm461 = vcmask 130048
    %v463 = vsel %vm461, %v64, 0
    %465 = vmatpush.bf16.msra.mxu0 %v370
    %466 = vmatpush.bf16.msra.mxu0 %v369
    %467 = vmatpush.bf16.msra.mxu0 %v368
    %468 = vmatpush.bf16.msra.mxu0 %v367
    %469 = vmatpush.bf16.msra.mxu0 %v366
    %470 = vmatpush.bf16.msra.mxu0 %v365
    %471 = vmatpush.bf16.msra.mxu0 %v364
    %472 = vmatpush.bf16.msra.mxu0 %v363
    %473 = vmatmul.bf16.gmra.mxu0 %v58
    %v474 = vpop.f32.mrf.mxu0
    %v475 = vadd.f32 %v165, %v474
    %v476 = vpop.f32.mrf.mxu0
    %v477 = vadd.f32 %v165, %v476
    %478 = vdwg.mxu0
    %479 = vmatpush.bf16.msra.mxu0 %v378
    %480 = vmatpush.bf16.msra.mxu0 %v377
    %481 = vmatpush.bf16.msra.mxu0 %v376
    %482 = vmatpush.bf16.msra.mxu0 %v375
    %483 = vmatpush.bf16.msra.mxu0 %v374
    %484 = vmatpush.bf16.msra.mxu0 %v373
    %485 = vmatpush.bf16.msra.mxu0 %v372
    %486 = vmatpush.bf16.msra.mxu0 %v371
    %487 = vmatmul.bf16.gmra.mxu0 %v59
    %v488 = vpop.f32.mrf.mxu0
    %v489 = vadd.f32 %v475, %v488
    %v490 = vpop.f32.mrf.mxu0
    %v491 = vadd.f32 %v477, %v490
    %492 = vdwg.mxu0
    %493 = vmatpush.bf16.msra.mxu0 %v386
    %494 = vmatpush.bf16.msra.mxu0 %v385
    %495 = vmatpush.bf16.msra.mxu0 %v384
    %496 = vmatpush.bf16.msra.mxu0 %v383
    %497 = vmatpush.bf16.msra.mxu0 %v382
    %498 = vmatpush.bf16.msra.mxu0 %v381
    %499 = vmatpush.bf16.msra.mxu0 %v380
    %500 = vmatpush.bf16.msra.mxu0 %v379
    %501 = vmatmul.bf16.gmra.mxu0 %v60
    %v502 = vpop.f32.mrf.mxu0
    %v503 = vadd.f32 %v489, %v502
    %v504 = vpop.f32.mrf.mxu0
    %v505 = vadd.f32 %v491, %v504
    %506 = vdwg.mxu0
    %507 = vmatpush.bf16.msra.mxu0 %v394
    %508 = vmatpush.bf16.msra.mxu0 %v393
    %509 = vmatpush.bf16.msra.mxu0 %v392
    %510 = vmatpush.bf16.msra.mxu0 %v391
    %511 = vmatpush.bf16.msra.mxu0 %v390
    %512 = vmatpush.bf16.msra.mxu0 %v389
    %513 = vmatpush.bf16.msra.mxu0 %v388
    %514 = vmatpush.bf16.msra.mxu0 %v387
    %515 = vmatmul.bf16.gmra.mxu0 %v61
    %v516 = vpop.f32.mrf.mxu0
    %v517 = vadd.f32 %v503, %v516
    %v518 = vpop.f32.mrf.mxu0
    %v519 = vadd.f32 %v505, %v518
    %520 = vdwg.mxu0
    %521 = vmatpush.bf16.msra.mxu0 %v402
    %522 = vmatpush.bf16.msra.mxu0 %v401
    %523 = vmatpush.bf16.msra.mxu0 %v400
    %524 = vmatpush.bf16.msra.mxu0 %v399
    %525 = vmatpush.bf16.msra.mxu0 %v398
    %526 = vmatpush.bf16.msra.mxu0 %v397
    %527 = vmatpush.bf16.msra.mxu0 %v396
    %528 = vmatpush.bf16.msra.mxu0 %v395
    %529 = vmatmul.bf16.gmra.mxu0 %v62
    %v530 = vpop.f32.mrf.mxu0
    %v531 = vadd.f32 %v517, %v530
    %v532 = vpop.f32.mrf.mxu0
    %v533 = vadd.f32 %v519, %v532
    %534 = vdwg.mxu0
    %535 = vmatpush.bf16.msra.mxu0 %v410
    %536 = vmatpush.bf16.msra.mxu0 %v409
    %537 = vmatpush.bf16.msra.mxu0 %v408
    %538 = vmatpush.bf16.msra.mxu0 %v407
    %539 = vmatpush.bf16.msra.mxu0 %v406
    %540 = vmatpush.bf16.msra.mxu0 %v405
    %541 = vmatpush.bf16.msra.mxu0 %v404
    %542 = vmatpush.bf16.msra.mxu0 %v403
    %543 = vmatmul.bf16.gmra.mxu0 %v63
    %v544 = vpop.f32.mrf.mxu0
    %v545 = vadd.f32 %v531, %v544
    %v546 = vpop.f32.mrf.mxu0
    %v547 = vadd.f32 %v533, %v546
    %548 = vdwg.mxu0
    %549 = vmatpush.bf16.msra.mxu0 0
    %550 = vmatpush.bf16.msra.mxu0 0
    %551 = vmatpush.bf16.msra.mxu0 0
    %552 = vmatpush.bf16.msra.mxu0 0
    %553 = vmatpush.bf16.msra.mxu0 0
    %554 = vmatpush.bf16.msra.mxu0 0
    %555 = vmatpush.bf16.msra.mxu0 0
    %556 = vmatpush.bf16.msra.mxu0 %v411
    %557 = vmatmul.bf16.gmra.mxu0 %v463
    %v558 = vpop.f32.mrf.mxu0
    %v559 = vadd.f32 %v545, %v558
    %v560 = vpop.f32.mrf.mxu0
    %v561 = vadd.f32 %v547, %v560
    %562 = vdwg.mxu0
    %v563 = vmax.f32 %v559, 0.0
    %v564 = vmax.f32 %v561, 0.0
    %v565 = vpack.c.bf16 %v564, %v563
    %v566 = vld [vmem:[%s3] sm:$0xf]
    %v567 = vld [vmem:[%s3 + $0x4] sm:$0xf]
    %v568 = vld [vmem:[%s3 + $0x8] sm:$0xf]
    %v569 = vld [vmem:[%s3 + $0xc] sm:$0xf]
    %v570 = vld [vmem:[%s3 + $0x10] sm:$0xf]
    %v571 = vld [vmem:[%s3 + $0x14] sm:$0xf]
    %v572 = vld [vmem:[%s3 + $0x18] sm:$0xf]
    %v573 = vld [vmem:[%s3 + $0x1c] sm:$0xf]
    %v574 = vld [vmem:[%s3 + $0x20] sm:$0xf]
    %v575 = vld [vmem:[%s3 + $0x24] sm:$0xf]
    %v576 = vld [vmem:[%s3 + $0x28] sm:$0xf]
    %v577 = vld [vmem:[%s3 + $0x2c] sm:$0xf]
    %v578 = vld [vmem:[%s3 + $0x30] sm:$0xf]
    %v579 = vld [vmem:[%s3 + $0x34] sm:$0xf]
    %v580 = vld [vmem:[%s3 + $0x38] sm:$0xf]
    %v581 = vld [vmem:[%s3 + $0x3c] sm:$0xf]
    %v582 = vld [vmem:[%s4] sm:$0x1]
    %v584 = vperm.slane %v582, 0
    %v602 = vunpack.c.l.b16 %v566
    %v603 = vunpack.c.l.b16 %v567
    %v604 = vunpack.c.l.b16 %v568
    %v605 = vunpack.c.l.b16 %v569
    %v606 = vunpack.c.l.b16 %v570
    %v607 = vunpack.c.l.b16 %v571
    %v608 = vunpack.c.l.b16 %v572
    %v609 = vunpack.c.l.b16 %v573
    %v610 = vunpack.c.l.b16 %v574
    %v611 = vunpack.c.l.b16 %v575
    %v612 = vunpack.c.l.b16 %v576
    %v613 = vunpack.c.l.b16 %v577
    %v614 = vunpack.c.l.b16 %v578
    %v615 = vunpack.c.l.b16 %v579
    %v616 = vunpack.c.l.b16 %v580
    %v617 = vunpack.c.l.b16 %v581
    %v618 = vpack.c.b16 %v603, %v602
    %v619 = vpack.c.b16 %v605, %v604
    %v620 = vpack.c.b16 %v607, %v606
    %v621 = vpack.c.b16 %v609, %v608
    %v622 = vpack.c.b16 %v611, %v610
    %v623 = vpack.c.b16 %v613, %v612
    %v624 = vpack.c.b16 %v615, %v614
    %v625 = vpack.c.b16 %v617, %v616
    %634 = vmatpush.bf16.msra.mxu0 %v625
    %635 = vmatpush.bf16.msra.mxu0 %v624
    %636 = vmatpush.bf16.msra.mxu0 %v623
    %637 = vmatpush.bf16.msra.mxu0 %v622
    %638 = vmatpush.bf16.msra.mxu0 %v621
    %639 = vmatpush.bf16.msra.mxu0 %v620
    %640 = vmatpush.bf16.msra.mxu0 %v619
    %641 = vmatpush.bf16.msra.mxu0 %v618
    %642 = vmatmul.bf16.gmra.mxu0 %v565
    %v643 = vpop.f32.mrf.mxu0
    %v644 = vadd.f32 %v584, %v643
    %v645 = vpop.f32.mrf.mxu0
    %v646 = vadd.f32 %v584, %v645
    %647 = vdwg.mxu0
    %v648 = vmax.f32 %v644, 0.0
    %v649 = vmax.f32 %v646, 0.0
    %v650 = vpack.c.bf16 %v649, %v648
    %v651 = vld [vmem:[%s5] sm:$0xf]
    %v652 = vld [vmem:[%s5 + $0x4] sm:$0xf]
    %v653 = vld [vmem:[%s5 + $0x8] sm:$0xf]
    %v654 = vld [vmem:[%s5 + $0xc] sm:$0xf]
    %v655 = vld [vmem:[%s5 + $0x10] sm:$0xf]
    %v656 = vld [vmem:[%s5 + $0x14] sm:$0xf]
    %v657 = vld [vmem:[%s5 + $0x18] sm:$0xf]
    %v658 = vld [vmem:[%s5 + $0x1c] sm:$0xf]
    %v659 = vld [vmem:[%s6] sm:$0x1]
    %v661 = vperm.slane %v659, 0
    %v671 = vunpack.c.l.b16 %v651
    %v672 = vunpack.c.l.b16 %v652
    %v673 = vunpack.c.l.b16 %v653
    %v674 = vunpack.c.l.b16 %v654
    %v675 = vunpack.c.l.b16 %v655
    %v676 = vunpack.c.l.b16 %v656
    %v677 = vunpack.c.l.b16 %v657
    %v678 = vunpack.c.l.b16 %v658
    %v679 = vpack.c.b16 %v672, %v671
    %v680 = vpack.c.b16 %v674, %v673
    %v681 = vpack.c.b16 %v676, %v675
    %v682 = vpack.c.b16 %v678, %v677
    %vm687 = vcmask 523264
    %v689 = vsel %vm687, %v650, 0
    %691 = vmatpush.bf16.msra.mxu0 0
    %692 = vmatpush.bf16.msra.mxu0 0
    %693 = vmatpush.bf16.msra.mxu0 0
    %694 = vmatpush.bf16.msra.mxu0 0
    %695 = vmatpush.bf16.msra.mxu0 %v682
    %696 = vmatpush.bf16.msra.mxu0 %v681
    %697 = vmatpush.bf16.msra.mxu0 %v680
    %698 = vmatpush.bf16.msra.mxu0 %v679
    %699 = vmatmul.bf16.gmra.mxu0 %v689
    %v700 = vpop.f32.mrf.mxu0
    %v701 = vadd.f32 %v661, %v700
    %v702 = vpop.f32.mrf.mxu0
    %v703 = vadd.f32 %v661, %v702
    %704 = vdwg.mxu0
    %vm705 = vcmask 80896
    %v706 = vsel %vm705, %v701, -inf
    %707 = vmax.xlane.f32.xlu0 %v706
    %v708 = vpop.xlane.xlu0 %707
    %v709 = vsel %vm705, %v703, -inf
    %710 = vmax.xlane.f32.xlu0 %v709
    %v711 = vpop.xlane.xlu0 %710
    %v712 = vsub.f32 %v701, %v708
    %v713 = vsub.f32 %v703, %v711
    %v714 = vmul.f32 %v712, 1.442695
    %v715 = vpow.pop %v714
    %v716 = vmul.f32 %v713, 1.442695
    %v717 = vpow.pop %v716
    %v718 = vsel %vm705, %v715, 0.0
    %719 = vadd.xlane.f32.xlu0 %v718
    %v720 = vpop.xlane.xlu0 %719
    %v721 = vsel %vm705, %v717, 0.0
    %722 = vadd.xlane.f32.xlu0 %v721
    %v723 = vpop.xlane.xlu0 %722
    %v724 = vlog2.pop %v720
    %v725 = vmul.f32 %v724, 0.6931472
    %v726 = vlog2.pop %v723
    %v727 = vmul.f32 %v726, 0.6931472
    %v728 = vsub.f32 %v712, %v725
    %v729 = vsub.f32 %v713, %v727
    %730 = vst.msk [vmem:[#allocation5] sm:$0xff] %vm705, %v728
    %731 = vst.msk [vmem:[#allocation5 + $0x8] sm:$0xff] %vm705, %v729
    // Predicated region
    $region34: #{tpu_custom_call.1} parent=1 // pred_check
      _
    $region35: #{tpu_custom_call.1} parent=1 // pred_check_branch
      %733 = sbr.rel (0) target = $region37
    $region36: #{tpu_custom_call.1} parent=1 // pred_region
      %735 = vsyncadd [#allocation4], 0
      %s736 = sshll.u32 [#allocation5], 4
      %s737 = int_to_ptr.vmem [resolvable:$true] %s736
      %s738 = sshll.u32 %s7, 4
      %s739 = int_to_ptr.hbm [resolvable:$true] %s738
      %744 = dma.vmem_to_hbm [thread:$0]  %s737, 256, %s739, [#allocation4], 128, 128, 8
    $region37: #{tpu_custom_call.1} parent=1 // pred_fallthru
      _
    // Predicated region
    $region38: #{tpu_custom_call.1} parent=1 // pred_check
      _
    $region39: #{tpu_custom_call.1} parent=1 // pred_check_branch
      %746 = sbr.rel (0) target = $region41
    $region40: #{tpu_custom_call.1} parent=1 // pred_region
      %748 = dma.done [#allocation4], 256
    $region41: #{tpu_custom_call.1} parent=1 // pred_fallthru
      _
    %749 = vsyncpa [#allocation3], 1
    %750 = vsyncpa [#allocation4], 1

</llo_original>
